<compile_context>
chip_gen: v7x
topology: tpu7x:2x2x1
jax: 0.10.0
libtpu: 0.0.40
codegen_flags: <defaults>
</compile_context>

<pallas_src>
import functools

import jax
import jax.numpy as jnp
from jax.experimental import pallas as pl
from jax.experimental.pallas import tpu as pltpu


def _round_up(x, m):
    return ((x + m - 1) // m) * m


def critic_kernel(obs_ref, act_ref,
                  w_o_ref, b_o_ref, w_a_ref, b_a_ref,
                  w2o_ref, w2a_ref, b2_ref, w3_ref, b3_ref,
                  out_ref):
    # ---- Layer 1 (two branches; bf16 MXU operands, f32 accumulate) ---------
    h_o = jnp.dot(obs_ref[...].astype(jnp.bfloat16), w_o_ref[...],
                  preferred_element_type=jnp.float32)
    h_o = jnp.maximum(h_o + b_o_ref[...], 0.0)                     # [bm, H1]

    h_a = jnp.dot(act_ref[...].astype(jnp.bfloat16), w_a_ref[...],
                  preferred_element_type=jnp.float32)
    h_a = jnp.maximum(h_a + b_a_ref[...], 0.0)                     # [bm, H1]

    # ---- Layer 2: cat([h_o, h_a]) @ W2 == h_o @ W2[:H1] + h_a @ W2[H1:] ----
    g = (jnp.dot(h_o.astype(jnp.bfloat16), w2o_ref[...],
                 preferred_element_type=jnp.float32)
         + jnp.dot(h_a.astype(jnp.bfloat16), w2a_ref[...],
                   preferred_element_type=jnp.float32))
    g = jnp.maximum(g + b2_ref[...], 0.0)                          # [bm, H2]

    # ---- Layer 3: lane-dense output.  w3_row (1,H2) contracted with g's H2
    # axis -> (1, bm): the batch lands on lanes, so the store is an unmasked
    # full-lane vst instead of a width-1 masked store.
    v = jax.lax.dot_general(w3_ref[...], g,
                            dimension_numbers=(((1,), (1,)), ((), ())),
                            preferred_element_type=jnp.float32)    # [1, bm]
    out_ref[...] = (v + b3_ref[...]).astype(out_ref.dtype)


@functools.partial(jax.jit, static_argnames=("bm",))
def critic_agent_forward(obs, act, params, *, bm=4096):
    B, obs_dim = obs.shape
    act_dim = act.shape[1]
    h1 = params["w_o"].shape[1]
    h2 = params["b2"].shape[1]

    # Batch tile: bm is the LANE width of the (1, bm) output block -> must be a
    # multiple of 128 (also fills v5e's 4x128 MXU sublane-wise).  Cap so small
    # batches are not over-padded; pad only if B is not a tile multiple.
    bm = max(128, _round_up(bm, 128))
    bm = min(bm, _round_up(B, 128))
    b_pad = _round_up(B, bm)

    obs_p = obs if b_pad == B else jnp.pad(obs, ((0, b_pad - B), (0, 0)))
    act_p = act if b_pad == B else jnp.pad(act, ((0, b_pad - B), (0, 0)))

    grid = (b_pad // bm,)

    flops = 2 * b_pad * (obs_dim * h1 + act_dim * h1 + 2 * h1 * h2 + h2)
    bytes_accessed = (
        b_pad * (obs_dim + act_dim) * 4            # obs + act (f32)
        + b_pad * 4                                # output (f32)
        + (obs_dim * h1 + act_dim * h1 + 2 * h1 * h2) * 2   # weights (bf16)
        + (2 * h1 + 2 * h2 + 1) * 4                # biases + w3 row (f32)
    )

    out = pl.pallas_call(
        critic_kernel,
        out_shape=jax.ShapeDtypeStruct((1, b_pad), jnp.float32),
        grid=grid,
        in_specs=[
            pl.BlockSpec((bm, obs_dim), lambda i: (i, 0)),   # obs: batch-tiled
            pl.BlockSpec((bm, act_dim), lambda i: (i, 0)),   # act: batch-tiled
            pl.BlockSpec((obs_dim, h1), lambda i: (0, 0)),   # W_o (resident)
            pl.BlockSpec((1, h1), lambda i: (0, 0)),         # b_o
            pl.BlockSpec((act_dim, h1), lambda i: (0, 0)),   # W_a
            pl.BlockSpec((1, h1), lambda i: (0, 0)),         # b_a
            pl.BlockSpec((h1, h2), lambda i: (0, 0)),        # W2[:H1]
            pl.BlockSpec((h1, h2), lambda i: (0, 0)),        # W2[H1:]
            pl.BlockSpec((1, h2), lambda i: (0, 0)),         # b2
            pl.BlockSpec((1, h2), lambda i: (0, 0)),         # W3 as a row
            pl.BlockSpec((1, 1), lambda i: (0, 0)),          # b3
        ],
        out_specs=pl.BlockSpec((1, bm), lambda i: (0, i)),   # lane-dense output
        compiler_params=pltpu.CompilerParams(
            dimension_semantics=("parallel",),
            vmem_limit_bytes=32 * 1024 * 1024,
        ),
        cost_estimate=pl.CostEstimate(
            flops=flops, transcendentals=0, bytes_accessed=bytes_accessed),
    )(obs_p, act_p,
      params["w_o_bf16"], params["b_o"], params["w_a_bf16"], params["b_a"],
      params["w2_top_bf16"], params["w2_bot_bf16"], params["b2"],
      params["w3_row"], params["b3"])

    # Undo the lane-dense layout: (1, b_pad) -> (B, 1).  Cheap (B f32 reads).
    return out[0, :B].reshape(B, 1)


def init_params(key, obs_dim, act_dim, h1, h2):
    """Deterministic PyTorch-Linear-style uniform init (+-1/sqrt(fan_in))."""
    def linear(k, fan_in, fan_out):
        k1, k2 = jax.random.split(k)
        bound = 1.0 / jnp.sqrt(fan_in)
        # stored as [in, out] (transpose of PyTorch's [out, in])
        w = jax.random.uniform(k1, (fan_in, fan_out), jnp.float32, -bound, bound)
        b = jax.random.uniform(k2, (1, fan_out), jnp.float32, -bound, bound)
        return w, b

    ks = jax.random.split(key, 4)
    w_o, b_o = linear(ks[0], obs_dim, h1)     # linear_o_c1
    w_a, b_a = linear(ks[1], act_dim, h1)     # linear_a_c1
    w2, b2 = linear(ks[2], 2 * h1, h2)        # linear_c2 (input = cat([x_o, x_a]))
    w3, b3 = linear(ks[3], h2, 1)             # linear_c

    return {
        # f32 originals (reference)
        "w_o": w_o, "b_o": b_o, "w_a": w_a, "b_a": b_a,
        "w2": w2, "b2": b2, "w3": w3, "b3": b3,
        # kernel operands (weights pre-cast to bf16 once at init, W2 split so
        # the kernel never has to materialize cat([x_o, x_a]))
        "w_o_bf16": w_o.astype(jnp.bfloat16),
        "w_a_bf16": w_a.astype(jnp.bfloat16),
        "w2_top_bf16": w2[:h1].astype(jnp.bfloat16),
        "w2_bot_bf16": w2[h1:].astype(jnp.bfloat16),
        "w3_row": w3.T,      # [1, h2], f32
    }


def reference_forward_f32(obs, act, params):
    """Exact f32 mirror of the PyTorch forward."""
    x_o = jnp.maximum(obs @ params["w_o"] + params["b_o"], 0.0)
    x_a = jnp.maximum(act @ params["w_a"] + params["b_a"], 0.0)
    x = jnp.concatenate([x_o, x_a], axis=1)
    h = jnp.maximum(x @ params["w2"] + params["b2"], 0.0)
    return h @ params["w3"] + params["b3"]


def reference_forward_bf16(obs, act, params):
    """Pure-JAX mirror of the kernel's bf16-MXU / f32-accumulate numerics."""
    h_o = jnp.dot(obs.astype(jnp.bfloat16), params["w_o_bf16"],
                  preferred_element_type=jnp.float32)
    h_o = jnp.maximum(h_o + params["b_o"], 0.0)
    h_a = jnp.dot(act.astype(jnp.bfloat16), params["w_a_bf16"],
                  preferred_element_type=jnp.float32)
    h_a = jnp.maximum(h_a + params["b_a"], 0.0)
    g = (jnp.dot(h_o.astype(jnp.bfloat16), params["w2_top_bf16"],
                 preferred_element_type=jnp.float32)
         + jnp.dot(h_a.astype(jnp.bfloat16), params["w2_bot_bf16"],
                   preferred_element_type=jnp.float32))
    g = jnp.maximum(g + params["b2"], 0.0)
    return jnp.sum(g * params["w3_row"], axis=-1, keepdims=True) + params["b3"]


if __name__ == "__main__":
    # Small shapes: obs=16, act=8, H1=64, H2=32.  B=200 with bm=128 exercises
    # a 2-step parallel grid, batch padding (200 -> 256) and the output slice.
    B, OBS, ACT, H1, H2 = 200, 16, 8, 64, 32

    key = jax.random.PRNGKey(0)
    k_obs, k_act, k_params = jax.random.split(key, 3)

    obs = jax.random.normal(k_obs, (B, OBS), jnp.float32)
    act = jax.random.normal(k_act, (B, ACT), jnp.float32)
    params = init_params(k_params, OBS, ACT, H1, H2)

    value = critic_agent_forward(obs, act, params, bm=128)
    value = jax.block_until_ready(value)

    assert value.shape == (B, 1)
    ref_bf16 = reference_forward_bf16(obs, act, params)
    ref_f32 = reference_forward_f32(obs, act, params)
    assert jnp.allclose(value, ref_bf16, atol=1e-2, rtol=1e-2)   # same-precision check
    assert jnp.allclose(value, ref_f32, atol=5e-2, rtol=5e-2)    # semantics vs f32

    print("KERNEL_OK")
</pallas_src>

<mosaic_0001>
module attributes {stable_mosaic.version = 11 : i64} {
  func.func @critic_kernel(%arg0: i32, %arg1: memref<128x16xf32, #tpu.memory_space<vmem>>, %arg2: memref<128x8xf32, #tpu.memory_space<vmem>>, %arg3: memref<16x64xbf16, #tpu.memory_space<vmem>>, %arg4: memref<1x64xf32, #tpu.memory_space<vmem>>, %arg5: memref<8x64xbf16, #tpu.memory_space<vmem>>, %arg6: memref<1x64xf32, #tpu.memory_space<vmem>>, %arg7: memref<64x32xbf16, #tpu.memory_space<vmem>>, %arg8: memref<64x32xbf16, #tpu.memory_space<vmem>>, %arg9: memref<1x32xf32, #tpu.memory_space<vmem>>, %arg10: memref<1x32xf32, #tpu.memory_space<vmem>>, %arg11: memref<1x1xf32, #tpu.memory_space<vmem>>, %arg12: memref<1x128xf32, #tpu.memory_space<vmem>>) attributes {dimension_semantics = [#tpu.dimension_semantics<parallel>], iteration_bounds = array<i64: 2>, scalar_prefetch = 0 : i64, scratch_operands = 0 : i64, tpu.core_type = #tpu.core_type<tc>, window_params = [{transform_indices = @transform_0, window_bounds = array<i64: 128, 16>}, {transform_indices = @transform_1, window_bounds = array<i64: 128, 8>}, {pipeline_mode = #tpu.pipeline_mode<synchronous>, transform_indices = @transform_2, window_bounds = array<i64: 16, 64>}, {pipeline_mode = #tpu.pipeline_mode<synchronous>, transform_indices = @transform_3, window_bounds = array<i64: 1, 64>}, {pipeline_mode = #tpu.pipeline_mode<synchronous>, transform_indices = @transform_4, window_bounds = array<i64: 8, 64>}, {pipeline_mode = #tpu.pipeline_mode<synchronous>, transform_indices = @transform_5, window_bounds = array<i64: 1, 64>}, {pipeline_mode = #tpu.pipeline_mode<synchronous>, transform_indices = @transform_6, window_bounds = array<i64: 64, 32>}, {pipeline_mode = #tpu.pipeline_mode<synchronous>, transform_indices = @transform_7, window_bounds = array<i64: 64, 32>}, {pipeline_mode = #tpu.pipeline_mode<synchronous>, transform_indices = @transform_8, window_bounds = array<i64: 1, 32>}, {pipeline_mode = #tpu.pipeline_mode<synchronous>, transform_indices = @transform_9, window_bounds = array<i64: 1, 32>}, {pipeline_mode = #tpu.pipeline_mode<synchronous>, transform_indices = @transform_10, window_bounds = array<i64: 1, 1>}, {transform_indices = @transform_11, window_bounds = array<i64: 1, 128>}]} {
    %c0 = arith.constant 0 : index
    %c0_0 = arith.constant 0 : index
    %0 = vector.load %arg1[%c0, %c0_0] : memref<128x16xf32, #tpu.memory_space<vmem>>, vector<128x16xf32>
    %1 = arith.truncf %0 : vector<128x16xf32> to vector<128x16xbf16>
    %c0_1 = arith.constant 0 : index
    %c0_2 = arith.constant 0 : index
    %2 = vector.load %arg3[%c0_1, %c0_2] : memref<16x64xbf16, #tpu.memory_space<vmem>>, vector<16x64xbf16>
    %cst = arith.constant dense<0.000000e+00> : vector<128x64xf32>
    %3 = tpu.matmul %1, %2, %cst {dimension_numbers = #tpu.dot_dimension_numbers<[1], [0], [0], [1], [0, 0, 1, 1], [], []>} : vector<128x16xbf16>, vector<16x64xbf16>, vector<128x64xf32> -> vector<128x64xf32>
    %c0_3 = arith.constant 0 : index
    %c0_4 = arith.constant 0 : index
    %4 = vector.load %arg4[%c0_3, %c0_4] : memref<1x64xf32, #tpu.memory_space<vmem>>, vector<1x64xf32>
    %5 = vector.broadcast %4 : vector<1x64xf32> to vector<128x64xf32>
    %6 = arith.addf %3, %5 : vector<128x64xf32>
    %cst_5 = arith.constant 0.000000e+00 : f32
    %7 = vector.broadcast %cst_5 : f32 to vector<128x64xf32>
    %8 = arith.maximumf %6, %7 : vector<128x64xf32>
    %c0_6 = arith.constant 0 : index
    %c0_7 = arith.constant 0 : index
    %9 = vector.load %arg2[%c0_6, %c0_7] : memref<128x8xf32, #tpu.memory_space<vmem>>, vector<128x8xf32>
    %10 = arith.truncf %9 : vector<128x8xf32> to vector<128x8xbf16>
    %c0_8 = arith.constant 0 : index
    %c0_9 = arith.constant 0 : index
    %11 = vector.load %arg5[%c0_8, %c0_9] : memref<8x64xbf16, #tpu.memory_space<vmem>>, vector<8x64xbf16>
    %cst_10 = arith.constant dense<0.000000e+00> : vector<128x64xf32>
    %12 = tpu.matmul %10, %11, %cst_10 {dimension_numbers = #tpu.dot_dimension_numbers<[1], [0], [0], [1], [0, 0, 1, 1], [], []>} : vector<128x8xbf16>, vector<8x64xbf16>, vector<128x64xf32> -> vector<128x64xf32>
    %c0_11 = arith.constant 0 : index
    %c0_12 = arith.constant 0 : index
    %13 = vector.load %arg6[%c0_11, %c0_12] : memref<1x64xf32, #tpu.memory_space<vmem>>, vector<1x64xf32>
    %14 = vector.broadcast %13 : vector<1x64xf32> to vector<128x64xf32>
    %15 = arith.addf %12, %14 : vector<128x64xf32>
    %cst_13 = arith.constant 0.000000e+00 : f32
    %16 = vector.broadcast %cst_13 : f32 to vector<128x64xf32>
    %17 = arith.maximumf %15, %16 : vector<128x64xf32>
    %18 = arith.truncf %8 : vector<128x64xf32> to vector<128x64xbf16>
    %c0_14 = arith.constant 0 : index
    %c0_15 = arith.constant 0 : index
    %19 = vector.load %arg7[%c0_14, %c0_15] : memref<64x32xbf16, #tpu.memory_space<vmem>>, vector<64x32xbf16>
    %cst_16 = arith.constant dense<0.000000e+00> : vector<128x32xf32>
    %20 = tpu.matmul %18, %19, %cst_16 {dimension_numbers = #tpu.dot_dimension_numbers<[1], [0], [0], [1], [0, 0, 1, 1], [], []>} : vector<128x64xbf16>, vector<64x32xbf16>, vector<128x32xf32> -> vector<128x32xf32>
    %21 = arith.truncf %17 : vector<128x64xf32> to vector<128x64xbf16>
    %c0_17 = arith.constant 0 : index
    %c0_18 = arith.constant 0 : index
    %22 = vector.load %arg8[%c0_17, %c0_18] : memref<64x32xbf16, #tpu.memory_space<vmem>>, vector<64x32xbf16>
    %cst_19 = arith.constant dense<0.000000e+00> : vector<128x32xf32>
    %23 = tpu.matmul %21, %22, %cst_19 {dimension_numbers = #tpu.dot_dimension_numbers<[1], [0], [0], [1], [0, 0, 1, 1], [], []>} : vector<128x64xbf16>, vector<64x32xbf16>, vector<128x32xf32> -> vector<128x32xf32>
    %24 = arith.addf %20, %23 : vector<128x32xf32>
    %c0_20 = arith.constant 0 : index
    %c0_21 = arith.constant 0 : index
    %25 = vector.load %arg9[%c0_20, %c0_21] : memref<1x32xf32, #tpu.memory_space<vmem>>, vector<1x32xf32>
    %26 = vector.broadcast %25 : vector<1x32xf32> to vector<128x32xf32>
    %27 = arith.addf %24, %26 : vector<128x32xf32>
    %cst_22 = arith.constant 0.000000e+00 : f32
    %28 = vector.broadcast %cst_22 : f32 to vector<128x32xf32>
    %29 = arith.maximumf %27, %28 : vector<128x32xf32>
    %c0_23 = arith.constant 0 : index
    %c0_24 = arith.constant 0 : index
    %30 = vector.load %arg10[%c0_23, %c0_24] : memref<1x32xf32, #tpu.memory_space<vmem>>, vector<1x32xf32>
    %cst_25 = arith.constant dense<0.000000e+00> : vector<1x128xf32>
    %31 = tpu.matmul %30, %29, %cst_25 {dimension_numbers = #tpu.dot_dimension_numbers<[1], [1], [0], [0], [0, 0, 1, 0], [], []>} : vector<1x32xf32>, vector<128x32xf32>, vector<1x128xf32> -> vector<1x128xf32>
    %c0_26 = arith.constant 0 : index
    %c0_27 = arith.constant 0 : index
    %32 = vector.load %arg11[%c0_26, %c0_27] : memref<1x1xf32, #tpu.memory_space<vmem>>, vector<1x1xf32>
    %33 = vector.broadcast %32 : vector<1x1xf32> to vector<1x128xf32>
    %34 = arith.addf %31, %33 : vector<1x128xf32>
    %c0_28 = arith.constant 0 : index
    %c0_29 = arith.constant 0 : index
    %35 = vector.load %arg12[%c0_28, %c0_29] : memref<1x128xf32, #tpu.memory_space<vmem>>, vector<1x128xf32>
    tpu.vector_store %arg12[%c0_28, %c0_29], %34 {strides = array<i32>} : memref<1x128xf32, #tpu.memory_space<vmem>>, vector<1x128xf32>,
    return
  }
  func.func @transform_0(%arg0: i32) -> (i32, i32) {
    %c0_i32 = arith.constant 0 : i32
    %c0_i32_0 = arith.constant 0 : i32
    return %arg0, %c0_i32 : i32, i32
  }
  func.func @transform_1(%arg0: i32) -> (i32, i32) {
    %c0_i32 = arith.constant 0 : i32
    %c0_i32_0 = arith.constant 0 : i32
    return %arg0, %c0_i32 : i32, i32
  }
  func.func @transform_2(%arg0: i32) -> (i32, i32) {
    %c0_i32 = arith.constant 0 : i32
    %c0_i32_0 = arith.constant 0 : i32
    %c0_i32_1 = arith.constant 0 : i32
    return %c0_i32, %c0_i32_0 : i32, i32
  }
  func.func @transform_3(%arg0: i32) -> (i32, i32) {
    %c0_i32 = arith.constant 0 : i32
    %c0_i32_0 = arith.constant 0 : i32
    %c0_i32_1 = arith.constant 0 : i32
    return %c0_i32, %c0_i32_0 : i32, i32
  }
  func.func @transform_4(%arg0: i32) -> (i32, i32) {
    %c0_i32 = arith.constant 0 : i32
    %c0_i32_0 = arith.constant 0 : i32
    %c0_i32_1 = arith.constant 0 : i32
    return %c0_i32, %c0_i32_0 : i32, i32
  }
  func.func @transform_5(%arg0: i32) -> (i32, i32) {
    %c0_i32 = arith.constant 0 : i32
    %c0_i32_0 = arith.constant 0 : i32
    %c0_i32_1 = arith.constant 0 : i32
    return %c0_i32, %c0_i32_0 : i32, i32
  }
  func.func @transform_6(%arg0: i32) -> (i32, i32) {
    %c0_i32 = arith.constant 0 : i32
    %c0_i32_0 = arith.constant 0 : i32
    %c0_i32_1 = arith.constant 0 : i32
    return %c0_i32, %c0_i32_0 : i32, i32
  }
  func.func @transform_7(%arg0: i32) -> (i32, i32) {
    %c0_i32 = arith.constant 0 : i32
    %c0_i32_0 = arith.constant 0 : i32
    %c0_i32_1 = arith.constant 0 : i32
    return %c0_i32, %c0_i32_0 : i32, i32
  }
  func.func @transform_8(%arg0: i32) -> (i32, i32) {
    %c0_i32 = arith.constant 0 : i32
    %c0_i32_0 = arith.constant 0 : i32
    %c0_i32_1 = arith.constant 0 : i32
    return %c0_i32, %c0_i32_0 : i32, i32
  }
  func.func @transform_9(%arg0: i32) -> (i32, i32) {
    %c0_i32 = arith.constant 0 : i32
    %c0_i32_0 = arith.constant 0 : i32
    %c0_i32_1 = arith.constant 0 : i32
    return %c0_i32, %c0_i32_0 : i32, i32
  }
  func.func @transform_10(%arg0: i32) -> (i32, i32) {
    %c0_i32 = arith.constant 0 : i32
    %c0_i32_0 = arith.constant 0 : i32
    %c0_i32_1 = arith.constant 0 : i32
    return %c0_i32, %c0_i32_0 : i32, i32
  }
  func.func @transform_11(%arg0: i32) -> (i32, i32) {
    %c0_i32 = arith.constant 0 : i32
    %c0_i32_0 = arith.constant 0 : i32
    return %c0_i32, %arg0 : i32, i32
  }
}

</mosaic_0001>

<llo_original>
// kernel: critic_agent_forward.1
$region0: #{critic_agent_forward.1}
  #allocation0 [shape = 'u32[]', space=smem, size = 0x4, offset = 0x4, fixed_abs, tag = 'smem constant byte address 0x4 - core index']
  #allocation1 [shape = 'u32[144,128]{1,0:T(1,128)}', space=vmem, size = 0x12000, scoped, tag = 'internal scratch']
  #allocation2 [shape = 'f32[1,1]{1,0:T(1,128)S(1)}', space=vmem, size = 0x200, scoped, tag = 'scoped memory for critic_agent_forward.1']
  %s0 = inlined_call_operand.vmem [shape: f32[256,16], index: 0, kind: input, shape index: {}]
  %s1 = inlined_call_operand.vmem [shape: f32[256,8], index: 1, kind: input, shape index: {}]
  %s2 = inlined_call_operand.vmem [shape: bf16[16,64], index: 2, kind: input, shape index: {}]
  %s3 = inlined_call_operand.vmem [shape: f32[1,64], index: 3, kind: input, shape index: {}]
  %s4 = inlined_call_operand.vmem [shape: bf16[8,64], index: 4, kind: input, shape index: {}]
  %s5 = inlined_call_operand.vmem [shape: f32[1,64], index: 5, kind: input, shape index: {}]
  %s6 = inlined_call_operand.vmem [shape: bf16[64,32], index: 6, kind: input, shape index: {}]
  %s7 = inlined_call_operand.vmem [shape: bf16[64,32], index: 7, kind: input, shape index: {}]
  %s8 = inlined_call_operand.vmem [shape: f32[1,32], index: 8, kind: input, shape index: {}]
  %s9 = inlined_call_operand.vmem [shape: f32[1,32], index: 9, kind: input, shape index: {}]
  %s10 = inlined_call_operand.<no memory space> [shape: f32[1,1], index: 10, kind: input, shape index: {}]
  %s11 = inlined_call_operand.vmem [shape: f32[1,256], index: 11, kind: output, shape index: {}]
  %s12 = sld [smem:[#allocation0]]
  $region77: #{critic_agent_forward.1} parent=0
    _
  %s14 = ssub.s32 1, %s12
  %s15 = scalar_select 0, %s14, %s12
  %v16 = vstv %s10
  %17 = vst [vmem:[#allocation2] sm:$0x1] %v16
  loop: start=0, step=1, limit=4
  $region2: #{critic_agent_forward.1} parent=0 // loop_pre_header
    _
  $region3: #{critic_agent_forward.1} parent=0 // loop_header
    %s19 = sphi 0, %s23
    %p20 = scmp.ge.s32.totalorder %s19, 4
    %s29 = sphi 0, %s31
    %s32 = sphi 0, %s29
    %s33 = sphi 0, %s32
    %s49 = sphi 0, %s33
    %s55 = sphi 0, %s57
    %s58 = sphi 0, %s55
    %s59 = sphi 0, %s58
    %s75 = sphi 0, %s59
    %s79 = sphi 0, %s79
    %s81 = sphi 0, %s79
    %s82 = sphi 0, %s81
    %s96 = sphi 0, %s82
    %s100 = sphi 0, %s100
    %s102 = sphi 0, %s100
    %s103 = sphi 0, %s102
    %s117 = sphi 0, %s103
    %s121 = sphi 0, %s121
    %s123 = sphi 0, %s121
    %s124 = sphi 0, %s123
    %s138 = sphi 0, %s124
    %s142 = sphi 0, %s142
    %s144 = sphi 0, %s142
    %s145 = sphi 0, %s144
    %s159 = sphi 0, %s145
    %s163 = sphi 0, %s163
    %s165 = sphi 0, %s163
    %s166 = sphi 0, %s165
    %s180 = sphi 0, %s166
    %s184 = sphi 0, %s184
    %s186 = sphi 0, %s184
    %s187 = sphi 0, %s186
    %s201 = sphi 0, %s187
    %s205 = sphi 0, %s205
    %s207 = sphi 0, %s205
    %s208 = sphi 0, %s207
    %s222 = sphi 0, %s208
    %s226 = sphi 0, %s226
    %s228 = sphi 0, %s226
    %s229 = sphi 0, %s228
    %s243 = sphi 0, %s229
    %s247 = sphi 0, %s247
    %s249 = sphi 0, %s247
    %s250 = sphi 0, %s249
    %s264 = sphi 0, %s250
    %s270 = sphi 0, %s272
    %s273 = sphi 0, %s270
    %s274 = sphi 0, %s273
    %s290 = sphi 0, %s274
  $region4: #{critic_agent_forward.1} parent=0 // loop_header_branch
    %22 = sbr.rel (%p20) target = $region8
  $region5: #{critic_agent_forward.1} parent=0 // loop_body
    %s24 = ssub.s32 %s19, 1
    %s25 = ssub.s32 %s19, 2
    %s26 = sadd.s32 %s19, 1
    %s27 = ssub.s32 %s19, %s26
    %p28 = scmp.eq.s32.totalorder %s27, 0
    %s30 = sadd.s32 %s29, 1
    %s31 = scalar_select %p28, %s29, %s30
    %p34 = pneg %p28
    %p35 = scmp.eq.s32.totalorder %s19, 1
    %p36 = por %p34, %p35
    %p37 = scmp.ne.s32.totalorder %s29, %s32
    %p38 = scmp.eq.s32.totalorder %s19, 0
    %p39 = por %p37, %p38
    %p40 = scmp.ne.s32.totalorder %s29, %s32
    %p41 = scmp.eq.s32.totalorder %s24, 1
    %p42 = por %p40, %p41
    %p43 = scmp.ne.s32.totalorder %s32, %s33
    %p44 = scmp.eq.s32.totalorder %s24, 0
    %p45 = por %p43, %p44
    %p46 = scmp.ne.s32.totalorder %s32, %s33
    %p47 = scmp.eq.s32.totalorder %s25, 1
    %p48 = por %p46, %p47
    %p50 = scmp.ne.s32.totalorder %s33, %s49
    %p51 = scmp.eq.s32.totalorder %s25, 0
    %p52 = por %p50, %p51
    %s53 = ssub.s32 %s19, %s26
    %p54 = scmp.eq.s32.totalorder %s53, 0
    %s56 = sadd.s32 %s55, 1
    %s57 = scalar_select %p54, %s55, %s56
    %p60 = pneg %p54
    %p61 = scmp.eq.s32.totalorder %s19, 1
    %p62 = por %p60, %p61
    %p63 = scmp.ne.s32.totalorder %s55, %s58
    %p64 = scmp.eq.s32.totalorder %s19, 0
    %p65 = por %p63, %p64
    %p66 = scmp.ne.s32.totalorder %s55, %s58
    %p67 = scmp.eq.s32.totalorder %s24, 1
    %p68 = por %p66, %p67
    %p69 = scmp.ne.s32.totalorder %s58, %s59
    %p70 = scmp.eq.s32.totalorder %s24, 0
    %p71 = por %p69, %p70
    %p72 = scmp.ne.s32.totalorder %s58, %s59
    %p73 = scmp.eq.s32.totalorder %s25, 1
    %p74 = por %p72, %p73
    %p76 = scmp.ne.s32.totalorder %s59, %s75
    %p77 = scmp.eq.s32.totalorder %s25, 0
    %p78 = por %p76, %p77
    %s80 = sadd.s32 %s79, 1
    %p83 = scmp.eq.s32.totalorder %s19, 1
    %p84 = scmp.ne.s32.totalorder %s79, %s81
    %p85 = scmp.eq.s32.totalorder %s19, 0
    %p86 = por %p84, %p85
    %p87 = scmp.ne.s32.totalorder %s79, %s81
    %p88 = scmp.eq.s32.totalorder %s24, 1
    %p89 = por %p87, %p88
    %p90 = scmp.ne.s32.totalorder %s81, %s82
    %p91 = scmp.eq.s32.totalorder %s24, 0
    %p92 = por %p90, %p91
    %p93 = scmp.ne.s32.totalorder %s81, %s82
    %p94 = scmp.eq.s32.totalorder %s25, 1
    %p95 = por %p93, %p94
    %p97 = scmp.ne.s32.totalorder %s82, %s96
    %p98 = scmp.eq.s32.totalorder %s25, 0
    %p99 = por %p97, %p98
    %s101 = sadd.s32 %s100, 1
    %p104 = scmp.eq.s32.totalorder %s19, 1
    %p105 = scmp.ne.s32.totalorder %s100, %s102
    %p106 = scmp.eq.s32.totalorder %s19, 0
    %p107 = por %p105, %p106
    %p108 = scmp.ne.s32.totalorder %s100, %s102
    %p109 = scmp.eq.s32.totalorder %s24, 1
    %p110 = por %p108, %p109
    %p111 = scmp.ne.s32.totalorder %s102, %s103
    %p112 = scmp.eq.s32.totalorder %s24, 0
    %p113 = por %p111, %p112
    %p114 = scmp.ne.s32.totalorder %s102, %s103
    %p115 = scmp.eq.s32.totalorder %s25, 1
    %p116 = por %p114, %p115
    %p118 = scmp.ne.s32.totalorder %s103, %s117
    %p119 = scmp.eq.s32.totalorder %s25, 0
    %p120 = por %p118, %p119
    %s122 = sadd.s32 %s121, 1
    %p125 = scmp.eq.s32.totalorder %s19, 1
    %p126 = scmp.ne.s32.totalorder %s121, %s123
    %p127 = scmp.eq.s32.totalorder %s19, 0
    %p128 = por %p126, %p127
    %p129 = scmp.ne.s32.totalorder %s121, %s123
    %p130 = scmp.eq.s32.totalorder %s24, 1
    %p131 = por %p129, %p130
    %p132 = scmp.ne.s32.totalorder %s123, %s124
    %p133 = scmp.eq.s32.totalorder %s24, 0
    %p134 = por %p132, %p133
    %p135 = scmp.ne.s32.totalorder %s123, %s124
    %p136 = scmp.eq.s32.totalorder %s25, 1
    %p137 = por %p135, %p136
    %p139 = scmp.ne.s32.totalorder %s124, %s138
    %p140 = scmp.eq.s32.totalorder %s25, 0
    %p141 = por %p139, %p140
    %s143 = sadd.s32 %s142, 1
    %p146 = scmp.eq.s32.totalorder %s19, 1
    %p147 = scmp.ne.s32.totalorder %s142, %s144
    %p148 = scmp.eq.s32.totalorder %s19, 0
    %p149 = por %p147, %p148
    %p150 = scmp.ne.s32.totalorder %s142, %s144
    %p151 = scmp.eq.s32.totalorder %s24, 1
    %p152 = por %p150, %p151
    %p153 = scmp.ne.s32.totalorder %s144, %s145
    %p154 = scmp.eq.s32.totalorder %s24, 0
    %p155 = por %p153, %p154
    %p156 = scmp.ne.s32.totalorder %s144, %s145
    %p157 = scmp.eq.s32.totalorder %s25, 1
    %p158 = por %p156, %p157
    %p160 = scmp.ne.s32.totalorder %s145, %s159
    %p161 = scmp.eq.s32.totalorder %s25, 0
    %p162 = por %p160, %p161
    %s164 = sadd.s32 %s163, 1
    %p167 = scmp.eq.s32.totalorder %s19, 1
    %p168 = scmp.ne.s32.totalorder %s163, %s165
    %p169 = scmp.eq.s32.totalorder %s19, 0
    %p170 = por %p168, %p169
    %p171 = scmp.ne.s32.totalorder %s163, %s165
    %p172 = scmp.eq.s32.totalorder %s24, 1
    %p173 = por %p171, %p172
    %p174 = scmp.ne.s32.totalorder %s165, %s166
    %p175 = scmp.eq.s32.totalorder %s24, 0
    %p176 = por %p174, %p175
    %p177 = scmp.ne.s32.totalorder %s165, %s166
    %p178 = scmp.eq.s32.totalorder %s25, 1
    %p179 = por %p177, %p178
    %p181 = scmp.ne.s32.totalorder %s166, %s180
    %p182 = scmp.eq.s32.totalorder %s25, 0
    %p183 = por %p181, %p182
    %s185 = sadd.s32 %s184, 1
    %p188 = scmp.eq.s32.totalorder %s19, 1
    %p189 = scmp.ne.s32.totalorder %s184, %s186
    %p190 = scmp.eq.s32.totalorder %s19, 0
    %p191 = por %p189, %p190
    %p192 = scmp.ne.s32.totalorder %s184, %s186
    %p193 = scmp.eq.s32.totalorder %s24, 1
    %p194 = por %p192, %p193
    %p195 = scmp.ne.s32.totalorder %s186, %s187
    %p196 = scmp.eq.s32.totalorder %s24, 0
    %p197 = por %p195, %p196
    %p198 = scmp.ne.s32.totalorder %s186, %s187
    %p199 = scmp.eq.s32.totalorder %s25, 1
    %p200 = por %p198, %p199
    %p202 = scmp.ne.s32.totalorder %s187, %s201
    %p203 = scmp.eq.s32.totalorder %s25, 0
    %p204 = por %p202, %p203
    %s206 = sadd.s32 %s205, 1
    %p209 = scmp.eq.s32.totalorder %s19, 1
    %p210 = scmp.ne.s32.totalorder %s205, %s207
    %p211 = scmp.eq.s32.totalorder %s19, 0
    %p212 = por %p210, %p211
    %p213 = scmp.ne.s32.totalorder %s205, %s207
    %p214 = scmp.eq.s32.totalorder %s24, 1
    %p215 = por %p213, %p214
    %p216 = scmp.ne.s32.totalorder %s207, %s208
    %p217 = scmp.eq.s32.totalorder %s24, 0
    %p218 = por %p216, %p217
    %p219 = scmp.ne.s32.totalorder %s207, %s208
    %p220 = scmp.eq.s32.totalorder %s25, 1
    %p221 = por %p219, %p220
    %p223 = scmp.ne.s32.totalorder %s208, %s222
    %p224 = scmp.eq.s32.totalorder %s25, 0
    %p225 = por %p223, %p224
    %s227 = sadd.s32 %s226, 1
    %p230 = scmp.eq.s32.totalorder %s19, 1
    %p231 = scmp.ne.s32.totalorder %s226, %s228
    %p232 = scmp.eq.s32.totalorder %s19, 0
    %p233 = por %p231, %p232
    %p234 = scmp.ne.s32.totalorder %s226, %s228
    %p235 = scmp.eq.s32.totalorder %s24, 1
    %p236 = por %p234, %p235
    %p237 = scmp.ne.s32.totalorder %s228, %s229
    %p238 = scmp.eq.s32.totalorder %s24, 0
    %p239 = por %p237, %p238
    %p240 = scmp.ne.s32.totalorder %s228, %s229
    %p241 = scmp.eq.s32.totalorder %s25, 1
    %p242 = por %p240, %p241
    %p244 = scmp.ne.s32.totalorder %s229, %s243
    %p245 = scmp.eq.s32.totalorder %s25, 0
    %p246 = por %p244, %p245
    %s248 = sadd.s32 %s247, 1
    %p251 = scmp.eq.s32.totalorder %s19, 1
    %p252 = scmp.ne.s32.totalorder %s247, %s249
    %p253 = scmp.eq.s32.totalorder %s19, 0
    %p254 = por %p252, %p253
    %p255 = scmp.ne.s32.totalorder %s247, %s249
    %p256 = scmp.eq.s32.totalorder %s24, 1
    %p257 = por %p255, %p256
    %p258 = scmp.ne.s32.totalorder %s249, %s250
    %p259 = scmp.eq.s32.totalorder %s24, 0
    %p260 = por %p258, %p259
    %p261 = scmp.ne.s32.totalorder %s249, %s250
    %p262 = scmp.eq.s32.totalorder %s25, 1
    %p263 = por %p261, %p262
    %p265 = scmp.ne.s32.totalorder %s250, %s264
    %p266 = scmp.eq.s32.totalorder %s25, 0
    %p267 = por %p265, %p266
    %s268 = ssub.s32 %s19, %s26
    %p269 = scmp.eq.s32.totalorder %s268, 0
    %s271 = sadd.s32 %s270, 1
    %s272 = scalar_select %p269, %s270, %s271
    %p275 = pneg %p269
    %p276 = scmp.eq.s32.totalorder %s19, 1
    %p277 = por %p275, %p276
    %p278 = scmp.ne.s32.totalorder %s270, %s273
    %p279 = scmp.eq.s32.totalorder %s19, 0
    %p280 = por %p278, %p279
    %p281 = scmp.ne.s32.totalorder %s270, %s273
    %p282 = scmp.eq.s32.totalorder %s24, 1
    %p283 = por %p281, %p282
    %p284 = scmp.ne.s32.totalorder %s273, %s274
    %p285 = scmp.eq.s32.totalorder %s24, 0
    %p286 = por %p284, %p285
    %p287 = scmp.ne.s32.totalorder %s273, %s274
    %p288 = scmp.eq.s32.totalorder %s25, 1
    %p289 = por %p287, %p288
    %p291 = scmp.ne.s32.totalorder %s274, %s290
    %p292 = scmp.eq.s32.totalorder %s25, 0
    %p293 = por %p291, %p292
    %p294 = scmp.le.s32.totalorder 1, %s19
    %p295 = scmp.lt.s32.totalorder %s19, 3
    %p296 = pnand %p294, %p295
    %p297 = pneg %p296
    // Predicated region
    $region9: #{critic_agent_forward.1} parent=5 // pred_check
      _
    $region10: #{critic_agent_forward.1} parent=5 // pred_check_branch
      %299 = sbr.rel (%p296) target = $region12
    $region11: #{critic_agent_forward.1} parent=5 // pred_region
      %s300 = ssub.s32 %s19, 1
      // Predicated region
      $region13: #{critic_agent_forward.1} parent=11 // pred_check
        %p301 = pneg %p92
      $region14: #{critic_agent_forward.1} parent=11 // pred_check_branch
        %303 = sbr.rel (%p301) target = $region16
      $region15: #{critic_agent_forward.1} parent=11 // pred_region
        _
      $region16: #{critic_agent_forward.1} parent=11 // pred_fallthru
        _
      // Predicated region
      $region17: #{critic_agent_forward.1} parent=11 // pred_check
        %p304 = pneg %p113
      $region18: #{critic_agent_forward.1} parent=11 // pred_check_branch
        %306 = sbr.rel (%p304) target = $region20
      $region19: #{critic_agent_forward.1} parent=11 // pred_region
        _
      $region20: #{critic_agent_forward.1} parent=11 // pred_fallthru
        _
      // Predicated region
      $region21: #{critic_agent_forward.1} parent=11 // pred_check
        %p307 = pneg %p134
      $region22: #{critic_agent_forward.1} parent=11 // pred_check_branch
        %309 = sbr.rel (%p307) target = $region24
      $region23: #{critic_agent_forward.1} parent=11 // pred_region
        _
      $region24: #{critic_agent_forward.1} parent=11 // pred_fallthru
        _
      // Predicated region
      $region25: #{critic_agent_forward.1} parent=11 // pred_check
        %p310 = pneg %p155
      $region26: #{critic_agent_forward.1} parent=11 // pred_check_branch
        %312 = sbr.rel (%p310) target = $region28
      $region27: #{critic_agent_forward.1} parent=11 // pred_region
        _
      $region28: #{critic_agent_forward.1} parent=11 // pred_fallthru
        _
      // Predicated region
      $region29: #{critic_agent_forward.1} parent=11 // pred_check
        %p313 = pneg %p176
      $region30: #{critic_agent_forward.1} parent=11 // pred_check_branch
        %315 = sbr.rel (%p313) target = $region32
      $region31: #{critic_agent_forward.1} parent=11 // pred_region
        _
      $region32: #{critic_agent_forward.1} parent=11 // pred_fallthru
        _
      // Predicated region
      $region33: #{critic_agent_forward.1} parent=11 // pred_check
        %p316 = pneg %p197
      $region34: #{critic_agent_forward.1} parent=11 // pred_check_branch
        %318 = sbr.rel (%p316) target = $region36
      $region35: #{critic_agent_forward.1} parent=11 // pred_region
        _
      $region36: #{critic_agent_forward.1} parent=11 // pred_fallthru
        _
      // Predicated region
      $region37: #{critic_agent_forward.1} parent=11 // pred_check
        %p319 = pneg %p218
      $region38: #{critic_agent_forward.1} parent=11 // pred_check_branch
        %321 = sbr.rel (%p319) target = $region40
      $region39: #{critic_agent_forward.1} parent=11 // pred_region
        _
      $region40: #{critic_agent_forward.1} parent=11 // pred_fallthru
        _
      // Predicated region
      $region41: #{critic_agent_forward.1} parent=11 // pred_check
        %p322 = pneg %p239
      $region42: #{critic_agent_forward.1} parent=11 // pred_check_branch
        %324 = sbr.rel (%p322) target = $region44
      $region43: #{critic_agent_forward.1} parent=11 // pred_region
        _
      $region44: #{critic_agent_forward.1} parent=11 // pred_fallthru
        _
      // Predicated region
      $region45: #{critic_agent_forward.1} parent=11 // pred_check
        %p325 = pneg %p260
      $region46: #{critic_agent_forward.1} parent=11 // pred_check_branch
        %327 = sbr.rel (%p325) target = $region48
      $region47: #{critic_agent_forward.1} parent=11 // pred_region
        _
      $region48: #{critic_agent_forward.1} parent=11 // pred_fallthru
        _
    $region12: #{critic_agent_forward.1} parent=5 // pred_fallthru
      _
    %p328 = scmp.lt.s32.totalorder %s19, 2
    // Predicated region
    $region49: #{critic_agent_forward.1} parent=5 // pred_check
      %p329 = pneg %p328
    $region50: #{critic_agent_forward.1} parent=5 // pred_check_branch
      %331 = sbr.rel (%p329) target = $region52
    $region51: #{critic_agent_forward.1} parent=5 // pred_region
      // Predicated region
      $region53: #{critic_agent_forward.1} parent=51 // pred_check
        %p332 = pneg %p39
      $region54: #{critic_agent_forward.1} parent=51 // pred_check_branch
        %334 = sbr.rel (%p332) target = $region56
      $region55: #{critic_agent_forward.1} parent=51 // pred_region
        %s335 = smul.u32 16, %s19
        %p336 = scmp.lt.s32.totalorder %s335, 31
        %s337 = scalar_select %p336, %s335, 31
        %s338 = smul.addr %s337, 8
        %s339 = scalar_lea.vmem %s0, %s338
        %s340 = smul.u32 16, %s19
      $region56: #{critic_agent_forward.1} parent=51 // pred_fallthru
        _
      // Predicated region
      $region57: #{critic_agent_forward.1} parent=51 // pred_check
        %p341 = pneg %p65
      $region58: #{critic_agent_forward.1} parent=51 // pred_check_branch
        %343 = sbr.rel (%p341) target = $region60
      $region59: #{critic_agent_forward.1} parent=51 // pred_region
        %s344 = smul.u32 16, %s19
        %p345 = scmp.lt.s32.totalorder %s344, 31
        %s346 = scalar_select %p345, %s344, 31
        %s347 = smul.addr %s346, 8
        %s348 = scalar_lea.vmem %s1, %s347
        %s349 = smul.u32 16, %s19
      $region60: #{critic_agent_forward.1} parent=51 // pred_fallthru
        _
    $region52: #{critic_agent_forward.1} parent=5 // pred_fallthru
      _
    %p350 = scmp.le.s32.totalorder 1, %s19
    %p351 = scmp.lt.s32.totalorder %s19, 3
    %p352 = pnand %p350, %p351
    %p353 = pneg %p352
    // Predicated region
    $region61: #{critic_agent_forward.1} parent=5 // pred_check
      _
    $region62: #{critic_agent_forward.1} parent=5 // pred_check_branch
      %355 = sbr.rel (%p352) target = $region64
    $region63: #{critic_agent_forward.1} parent=5 // pred_region
      %s356 = ssub.s32 %s19, 1
      %s357 = smul.u32 16, %s24
      %p358 = scmp.lt.s32.totalorder %s357, 31
      %s359 = scalar_select %p358, %s357, 31
      %s360 = smul.addr %s359, 8
      %s361 = scalar_lea.vmem %s0, %s360
      %p362 = pneg %p45
      %p363 = pneg %p42
      %s364 = smul.u32 16, %s24
      %p365 = scmp.lt.s32.totalorder %s364, 31
      %s366 = scalar_select %p365, %s364, 31
      %s367 = smul.addr %s366, 8
      %s368 = scalar_lea.vmem %s1, %s367
      %p369 = pneg %p71
      %p370 = pneg %p68
      %p371 = pneg %p92
      %p372 = pneg %p89
      %p373 = pneg %p113
      %p374 = pneg %p110
      %p375 = pneg %p134
      %p376 = pneg %p131
      %p377 = pneg %p155
      %p378 = pneg %p152
      %p379 = pneg %p176
      %p380 = pneg %p173
      %p381 = pneg %p197
      %p382 = pneg %p194
      %p383 = pneg %p218
      %p384 = pneg %p215
      %p385 = pneg %p239
      %p386 = pneg %p236
      %p387 = pneg %p260
      %p388 = pneg %p257
      %p389 = pneg %p286
      %p390 = pneg %p283
      %p391 = scmp.lt.s32.totalorder %s24, 1
      %s392 = scalar_select %p391, %s24, 1
      %s393 = scalar_lea.vmem %s11, %s392
      %s394 = smul.u32 16, %s24
      %p395 = scmp.lt.s32.totalorder %s394, 31
      %s396 = scalar_select %p395, %s394, 31
      %s397 = smul.addr %s396, 8
      %s398 = scalar_lea.vmem %s0, %s397
      %s399 = smul.u32 16, %s24
      %s400 = smul.u32 16, %s24
      %p401 = scmp.lt.s32.totalorder %s400, 31
      %s402 = scalar_select %p401, %s400, 31
      %s403 = smul.addr %s402, 8
      %s404 = scalar_lea.vmem %s1, %s403
      %s405 = smul.u32 16, %s24
      %p406 = scmp.lt.s32.totalorder %s24, 1
      %s407 = scalar_select %p406, %s24, 1
      %s408 = scalar_lea.vmem %s11, %s407
      %v410 = vld [vmem:[%s398] sm:$0xff]
      %v411 = vld [vmem:[%s398 + $0x8] sm:$0xff]
      %v412 = vld [vmem:[%s398 + $0x10] sm:$0xff]
      %v413 = vld [vmem:[%s398 + $0x18] sm:$0xff]
      %v414 = vld [vmem:[%s398 + $0x20] sm:$0xff]
      %v415 = vld [vmem:[%s398 + $0x28] sm:$0xff]
      %v416 = vld [vmem:[%s398 + $0x30] sm:$0xff]
      %v417 = vld [vmem:[%s398 + $0x38] sm:$0xff]
      %v418 = vld [vmem:[%s398 + $0x40] sm:$0xff]
      %v419 = vld [vmem:[%s398 + $0x48] sm:$0xff]
      %v420 = vld [vmem:[%s398 + $0x50] sm:$0xff]
      %v421 = vld [vmem:[%s398 + $0x58] sm:$0xff]
      %v422 = vld [vmem:[%s398 + $0x60] sm:$0xff]
      %v423 = vld [vmem:[%s398 + $0x68] sm:$0xff]
      %v424 = vld [vmem:[%s398 + $0x70] sm:$0xff]
      %v425 = vld [vmem:[%s398 + $0x78] sm:$0xff]
      %v426 = vpack.c.bf16 %v411, %v410
      %v427 = vpack.c.bf16 %v413, %v412
      %v428 = vpack.c.bf16 %v415, %v414
      %v429 = vpack.c.bf16 %v417, %v416
      %v430 = vpack.c.bf16 %v419, %v418
      %v431 = vpack.c.bf16 %v421, %v420
      %v432 = vpack.c.bf16 %v423, %v422
      %v433 = vpack.c.bf16 %v425, %v424
      %v434 = vld [vmem:[%s2] sm:$0xf]
      %v435 = vld [vmem:[%s2 + $0x4] sm:$0xf]
      %v436 = vld [vmem:[%s3] sm:$0x1]
      %v438 = vlaneseq
      %v439 = vshrl.u32 %v438, 7
      %v440 = vsub.s32 0, %v439
      %v441 = vrot.slane %v436, %v440
      %v445 = vunpack.c.l.b16 %v434
      %v446 = vunpack.c.l.b16 %v435
      %v447 = vpack.c.b16 %v446, %v445
      %vm449 = vcmask 130048
      %v451 = vsel %vm449, %v426, 0
      %v454 = vsel %vm449, %v427, 0
      %v457 = vsel %vm449, %v428, 0
      %v460 = vsel %vm449, %v429, 0
      %v463 = vsel %vm449, %v430, 0
      %v466 = vsel %vm449, %v431, 0
      %v469 = vsel %vm449, %v432, 0
      %v472 = vsel %vm449, %v433, 0
      %474 = vmatprep.subr.bf16.mxu0 0
      %475 = vmatpush1.bf16.msra.mxu0 %v447
      %476 = vmatprep.subr.bf16.mxu0 0
      %477 = vmatpush1.bf16.msra.mxu0 0
      %478 = vmatprep.subr.bf16.mxu0 0
      %479 = vmatpush1.bf16.msra.mxu0 0
      %480 = vmatprep.subr.bf16.mxu0 0
      %481 = vmatpush1.bf16.msra.mxu0 0
      %482 = vmatprep.subr.bf16.mxu0 0
      %483 = vmatpush1.bf16.msra.mxu0 0
      %484 = vmatprep.subr.bf16.mxu0 0
      %485 = vmatpush1.bf16.msra.mxu0 0
      %486 = vmatprep.subr.bf16.mxu0 0
      %487 = vmatpush1.bf16.msra.mxu0 0
      %488 = vmatprep.subr.bf16.mxu0 0
      %489 = vmatpush1.bf16.msra.mxu0 0
      %490 = vmatprep.subr.bf16.mxu0 0
      %491 = vmatpush1.bf16.msra.mxu0 0
      %492 = vmatprep.subr.bf16.mxu0 0
      %493 = vmatpush1.bf16.msra.mxu0 0
      %494 = vmatprep.subr.bf16.mxu0 0
      %495 = vmatpush1.bf16.msra.mxu0 0
      %496 = vmatprep.subr.bf16.mxu0 0
      %497 = vmatpush1.bf16.msra.mxu0 0
      %498 = vmatprep.subr.bf16.mxu0 0
      %499 = vmatpush1.bf16.msra.mxu0 0
      %500 = vmatprep.subr.bf16.mxu0 0
      %501 = vmatpush1.bf16.msra.mxu0 0
      %502 = vmatprep.subr.bf16.mxu0 0
      %503 = vmatpush1.bf16.msra.mxu0 0
      %504 = vmatprep.subr.bf16.mxu0 0
      %505 = vmatpush1.bf16.msra.mxu0 0
      %506 = vmatprep.mubr.bf16.mxu0 0
      %507 = vmatmul.mubr.bf16.gmra.mrb[0].mxu0 %v451
      %v508 = vpop.f32.mrb[0].mxu0
      %v509 = vadd.f32 %v441, %v508
      %v510 = vpop.f32.mrb[0].mxu0
      %v511 = vpop.f32.mrb[0].mxu0
      %v512 = vadd.f32 %v441, %v511
      %v513 = vpop.f32.mrb[0].mxu0
      %514 = vmatprep.mubr.bf16.mxu0 0
      %515 = vmatmul.mubr.bf16.gmra.mrb[0].mxu0 %v454
      %v516 = vpop.f32.mrb[0].mxu0
      %v517 = vadd.f32 %v441, %v516
      %v518 = vpop.f32.mrb[0].mxu0
      %v519 = vpop.f32.mrb[0].mxu0
      %v520 = vadd.f32 %v441, %v519
      %v521 = vpop.f32.mrb[0].mxu0
      %522 = vmatprep.mubr.bf16.mxu0 0
      %523 = vmatmul.mubr.bf16.gmra.mrb[0].mxu0 %v457
      %v524 = vpop.f32.mrb[0].mxu0
      %v525 = vadd.f32 %v441, %v524
      %v526 = vpop.f32.mrb[0].mxu0
      %v527 = vpop.f32.mrb[0].mxu0
      %v528 = vadd.f32 %v441, %v527
      %v529 = vpop.f32.mrb[0].mxu0
      %530 = vmatprep.mubr.bf16.mxu0 0
      %531 = vmatmul.mubr.bf16.gmra.mrb[0].mxu0 %v460
      %v532 = vpop.f32.mrb[0].mxu0
      %v533 = vadd.f32 %v441, %v532
      %v534 = vpop.f32.mrb[0].mxu0
      %v535 = vpop.f32.mrb[0].mxu0
      %v536 = vadd.f32 %v441, %v535
      %v537 = vpop.f32.mrb[0].mxu0
      %538 = vmatprep.mubr.bf16.mxu0 0
      %539 = vmatmul.mubr.bf16.gmra.mrb[0].mxu0 %v463
      %v540 = vpop.f32.mrb[0].mxu0
      %v541 = vadd.f32 %v441, %v540
      %v542 = vpop.f32.mrb[0].mxu0
      %v543 = vpop.f32.mrb[0].mxu0
      %v544 = vadd.f32 %v441, %v543
      %v545 = vpop.f32.mrb[0].mxu0
      %546 = vmatprep.mubr.bf16.mxu0 0
      %547 = vmatmul.mubr.bf16.gmra.mrb[0].mxu0 %v466
      %v548 = vpop.f32.mrb[0].mxu0
      %v549 = vadd.f32 %v441, %v548
      %v550 = vpop.f32.mrb[0].mxu0
      %v551 = vpop.f32.mrb[0].mxu0
      %v552 = vadd.f32 %v441, %v551
      %v553 = vpop.f32.mrb[0].mxu0
      %554 = vmatprep.mubr.bf16.mxu0 0
      %555 = vmatmul.mubr.bf16.gmra.mrb[0].mxu0 %v469
      %v556 = vpop.f32.mrb[0].mxu0
      %v557 = vadd.f32 %v441, %v556
      %v558 = vpop.f32.mrb[0].mxu0
      %v559 = vpop.f32.mrb[0].mxu0
      %v560 = vadd.f32 %v441, %v559
      %v561 = vpop.f32.mrb[0].mxu0
      %562 = vmatprep.mubr.bf16.mxu0 0
      %563 = vmatmul.mubr.bf16.gmra.mrb[0].mxu0 %v472
      %v564 = vpop.f32.mrb[0].mxu0
      %v565 = vadd.f32 %v441, %v564
      %v566 = vpop.f32.mrb[0].mxu0
      %v567 = vpop.f32.mrb[0].mxu0
      %v568 = vadd.f32 %v441, %v567
      %v569 = vpop.f32.mrb[0].mxu0
      %570 = vdwg.mxu0
      %v571 = vmax.f32 %v509, 0.0
      %v572 = vmax.f32 %v512, 0.0
      %v573 = vmax.f32 %v517, 0.0
      %v574 = vmax.f32 %v520, 0.0
      %v575 = vmax.f32 %v525, 0.0
      %v576 = vmax.f32 %v528, 0.0
      %v577 = vmax.f32 %v533, 0.0
      %v578 = vmax.f32 %v536, 0.0
      %v579 = vmax.f32 %v541, 0.0
      %v580 = vmax.f32 %v544, 0.0
      %v581 = vmax.f32 %v549, 0.0
      %v582 = vmax.f32 %v552, 0.0
      %v583 = vmax.f32 %v557, 0.0
      %v584 = vmax.f32 %v560, 0.0
      %v585 = vmax.f32 %v565, 0.0
      %v586 = vmax.f32 %v568, 0.0
      %v587 = vld [vmem:[%s404] sm:$0xff]
      %v588 = vld [vmem:[%s404 + $0x8] sm:$0xff]
      %v589 = vld [vmem:[%s404 + $0x10] sm:$0xff]
      %v590 = vld [vmem:[%s404 + $0x18] sm:$0xff]
      %v591 = vld [vmem:[%s404 + $0x20] sm:$0xff]
      %v592 = vld [vmem:[%s404 + $0x28] sm:$0xff]
      %v593 = vld [vmem:[%s404 + $0x30] sm:$0xff]
      %v594 = vld [vmem:[%s404 + $0x38] sm:$0xff]
      %v595 = vld [vmem:[%s404 + $0x40] sm:$0xff]
      %v596 = vld [vmem:[%s404 + $0x48] sm:$0xff]
      %v597 = vld [vmem:[%s404 + $0x50] sm:$0xff]
      %v598 = vld [vmem:[%s404 + $0x58] sm:$0xff]
      %v599 = vld [vmem:[%s404 + $0x60] sm:$0xff]
      %v600 = vld [vmem:[%s404 + $0x68] sm:$0xff]
      %v601 = vld [vmem:[%s404 + $0x70] sm:$0xff]
      %v602 = vld [vmem:[%s404 + $0x78] sm:$0xff]
      %v603 = vpack.c.bf16 %v588, %v587
      %v604 = vpack.c.bf16 %v590, %v589
      %v605 = vpack.c.bf16 %v592, %v591
      %v606 = vpack.c.bf16 %v594, %v593
      %v607 = vpack.c.bf16 %v596, %v595
      %v608 = vpack.c.bf16 %v598, %v597
      %v609 = vpack.c.bf16 %v600, %v599
      %v610 = vpack.c.bf16 %v602, %v601
      %v611 = vld [vmem:[%s4] sm:$0xf]
      %v612 = vld [vmem:[%s5] sm:$0x1]
      %v614 = vlaneseq
      %v615 = vshrl.u32 %v614, 7
      %v616 = vsub.s32 0, %v615
      %v617 = vrot.slane %v612, %v616
      %vm619 = vcmask 64512
      %v621 = vsel %vm619, %v603, 0
      %v624 = vsel %vm619, %v604, 0
      %v627 = vsel %vm619, %v605, 0
      %v630 = vsel %vm619, %v606, 0
      %v633 = vsel %vm619, %v607, 0
      %v636 = vsel %vm619, %v608, 0
      %v639 = vsel %vm619, %v609, 0
      %v642 = vsel %vm619, %v610, 0
      %vm644 = vcmask 1043456
      %v646 = vsel %vm644, %v611, 0
      %648 = vmatprep.subr.bf16.mxu0 0
      %649 = vmatpush1.bf16.msra.mxu0 %v646
      %650 = vmatprep.subr.bf16.mxu0 0
      %651 = vmatpush1.bf16.msra.mxu0 0
      %652 = vmatprep.subr.bf16.mxu0 0
      %653 = vmatpush1.bf16.msra.mxu0 0
      %654 = vmatprep.subr.bf16.mxu0 0
      %655 = vmatpush1.bf16.msra.mxu0 0
      %656 = vmatprep.subr.bf16.mxu0 0
      %657 = vmatpush1.bf16.msra.mxu0 0
      %658 = vmatprep.subr.bf16.mxu0 0
      %659 = vmatpush1.bf16.msra.mxu0 0
      %660 = vmatprep.subr.bf16.mxu0 0
      %661 = vmatpush1.bf16.msra.mxu0 0
      %662 = vmatprep.subr.bf16.mxu0 0
      %663 = vmatpush1.bf16.msra.mxu0 0
      %664 = vmatprep.subr.bf16.mxu0 0
      %665 = vmatpush1.bf16.msra.mxu0 0
      %666 = vmatprep.subr.bf16.mxu0 0
      %667 = vmatpush1.bf16.msra.mxu0 0
      %668 = vmatprep.subr.bf16.mxu0 0
      %669 = vmatpush1.bf16.msra.mxu0 0
      %670 = vmatprep.subr.bf16.mxu0 0
      %671 = vmatpush1.bf16.msra.mxu0 0
      %672 = vmatprep.subr.bf16.mxu0 0
      %673 = vmatpush1.bf16.msra.mxu0 0
      %674 = vmatprep.subr.bf16.mxu0 0
      %675 = vmatpush1.bf16.msra.mxu0 0
      %676 = vmatprep.subr.bf16.mxu0 0
      %677 = vmatpush1.bf16.msra.mxu0 0
      %678 = vmatprep.subr.bf16.mxu0 0
      %679 = vmatpush1.bf16.msra.mxu0 0
      %680 = vmatprep.mubr.bf16.mxu0 0
      %681 = vmatmul.mubr.bf16.gmra.mrb[0].mxu0 %v621
      %v682 = vpop.f32.mrb[0].mxu0
      %v683 = vadd.f32 %v617, %v682
      %v684 = vpop.f32.mrb[0].mxu0
      %v685 = vpop.f32.mrb[0].mxu0
      %v686 = vadd.f32 %v617, %v685
      %v687 = vpop.f32.mrb[0].mxu0
      %688 = vmatprep.mubr.bf16.mxu0 0
      %689 = vmatmul.mubr.bf16.gmra.mrb[0].mxu0 %v624
      %v690 = vpop.f32.mrb[0].mxu0
      %v691 = vadd.f32 %v617, %v690
      %v692 = vpop.f32.mrb[0].mxu0
      %v693 = vpop.f32.mrb[0].mxu0
      %v694 = vadd.f32 %v617, %v693
      %v695 = vpop.f32.mrb[0].mxu0
      %696 = vmatprep.mubr.bf16.mxu0 0
      %697 = vmatmul.mubr.bf16.gmra.mrb[0].mxu0 %v627
      %v698 = vpop.f32.mrb[0].mxu0
      %v699 = vadd.f32 %v617, %v698
      %v700 = vpop.f32.mrb[0].mxu0
      %v701 = vpop.f32.mrb[0].mxu0
      %v702 = vadd.f32 %v617, %v701
      %v703 = vpop.f32.mrb[0].mxu0
      %704 = vmatprep.mubr.bf16.mxu0 0
      %705 = vmatmul.mubr.bf16.gmra.mrb[0].mxu0 %v630
      %v706 = vpop.f32.mrb[0].mxu0
      %v707 = vadd.f32 %v617, %v706
      %v708 = vpop.f32.mrb[0].mxu0
      %v709 = vpop.f32.mrb[0].mxu0
      %v710 = vadd.f32 %v617, %v709
      %v711 = vpop.f32.mrb[0].mxu0
      %712 = vmatprep.mubr.bf16.mxu0 0
      %713 = vmatmul.mubr.bf16.gmra.mrb[0].mxu0 %v633
      %v714 = vpop.f32.mrb[0].mxu0
      %v715 = vadd.f32 %v617, %v714
      %v716 = vpop.f32.mrb[0].mxu0
      %v717 = vpop.f32.mrb[0].mxu0
      %v718 = vadd.f32 %v617, %v717
      %v719 = vpop.f32.mrb[0].mxu0
      %720 = vmatprep.mubr.bf16.mxu0 0
      %721 = vmatmul.mubr.bf16.gmra.mrb[0].mxu0 %v636
      %v722 = vpop.f32.mrb[0].mxu0
      %v723 = vadd.f32 %v617, %v722
      %v724 = vpop.f32.mrb[0].mxu0
      %v725 = vpop.f32.mrb[0].mxu0
      %v726 = vadd.f32 %v617, %v725
      %v727 = vpop.f32.mrb[0].mxu0
      %728 = vmatprep.mubr.bf16.mxu0 0
      %729 = vmatmul.mubr.bf16.gmra.mrb[0].mxu0 %v639
      %v730 = vpop.f32.mrb[0].mxu0
      %v731 = vadd.f32 %v617, %v730
      %v732 = vpop.f32.mrb[0].mxu0
      %v733 = vpop.f32.mrb[0].mxu0
      %v734 = vadd.f32 %v617, %v733
      %v735 = vpop.f32.mrb[0].mxu0
      %736 = vmatprep.mubr.bf16.mxu0 0
      %737 = vmatmul.mubr.bf16.gmra.mrb[0].mxu0 %v642
      %v738 = vpop.f32.mrb[0].mxu0
      %v739 = vadd.f32 %v617, %v738
      %v740 = vpop.f32.mrb[0].mxu0
      %v741 = vpop.f32.mrb[0].mxu0
      %v742 = vadd.f32 %v617, %v741
      %v743 = vpop.f32.mrb[0].mxu0
      %744 = vdwg.mxu0
      %v745 = vmax.f32 %v683, 0.0
      %v746 = vmax.f32 %v686, 0.0
      %v747 = vmax.f32 %v691, 0.0
      %v748 = vmax.f32 %v694, 0.0
      %v749 = vmax.f32 %v699, 0.0
      %v750 = vmax.f32 %v702, 0.0
      %v751 = vmax.f32 %v707, 0.0
      %v752 = vmax.f32 %v710, 0.0
      %v753 = vmax.f32 %v715, 0.0
      %v754 = vmax.f32 %v718, 0.0
      %v755 = vmax.f32 %v723, 0.0
      %v756 = vmax.f32 %v726, 0.0
      %v757 = vmax.f32 %v731, 0.0
      %v758 = vmax.f32 %v734, 0.0
      %v759 = vmax.f32 %v739, 0.0
      %v760 = vmax.f32 %v742, 0.0
      %v761 = vpack.c.bf16 %v572, %v571
      %v762 = vpack.c.bf16 %v574, %v573
      %v763 = vpack.c.bf16 %v576, %v575
      %v764 = vpack.c.bf16 %v578, %v577
      %v765 = vpack.c.bf16 %v580, %v579
      %v766 = vpack.c.bf16 %v582, %v581
      %v767 = vpack.c.bf16 %v584, %v583
      %v768 = vpack.c.bf16 %v586, %v585
      %v769 = vld [vmem:[%s6] sm:$0xf]
      %v770 = vld [vmem:[%s6 + $0x4] sm:$0xf]
      %v771 = vld [vmem:[%s6 + $0x8] sm:$0xf]
      %v772 = vld [vmem:[%s6 + $0xc] sm:$0xf]
      %v773 = vld [vmem:[%s6 + $0x10] sm:$0xf]
      %v774 = vld [vmem:[%s6 + $0x14] sm:$0xf]
      %v775 = vld [vmem:[%s6 + $0x18] sm:$0xf]
      %v776 = vld [vmem:[%s6 + $0x1c] sm:$0xf]
      %v777 = vpack.c.bf16 %v746, %v745
      %v778 = vpack.c.bf16 %v748, %v747
      %v779 = vpack.c.bf16 %v750, %v749
      %v780 = vpack.c.bf16 %v752, %v751
      %v781 = vpack.c.bf16 %v754, %v753
      %v782 = vpack.c.bf16 %v756, %v755
      %v783 = vpack.c.bf16 %v758, %v757
      %v784 = vpack.c.bf16 %v760, %v759
      %v785 = vld [vmem:[%s7] sm:$0xf]
      %v786 = vld [vmem:[%s7 + $0x4] sm:$0xf]
      %v787 = vld [vmem:[%s7 + $0x8] sm:$0xf]
      %v788 = vld [vmem:[%s7 + $0xc] sm:$0xf]
      %v789 = vld [vmem:[%s7 + $0x10] sm:$0xf]
      %v790 = vld [vmem:[%s7 + $0x14] sm:$0xf]
      %v791 = vld [vmem:[%s7 + $0x18] sm:$0xf]
      %v792 = vld [vmem:[%s7 + $0x1c] sm:$0xf]
      %v801 = vunpack.c.l.b16 %v785
      %v802 = vunpack.c.l.b16 %v786
      %v803 = vunpack.c.l.b16 %v787
      %v804 = vunpack.c.l.b16 %v788
      %v805 = vunpack.c.l.b16 %v789
      %v806 = vunpack.c.l.b16 %v790
      %v807 = vunpack.c.l.b16 %v791
      %v808 = vunpack.c.l.b16 %v792
      %v809 = vpack.c.b16 %v802, %v801
      %v810 = vpack.c.b16 %v804, %v803
      %v811 = vpack.c.b16 %v806, %v805
      %v812 = vpack.c.b16 %v808, %v807
      %vm817 = vcmask 523264
      %v819 = vsel %vm817, %v777, 0
      %v822 = vsel %vm817, %v778, 0
      %v825 = vsel %vm817, %v779, 0
      %v828 = vsel %vm817, %v780, 0
      %v831 = vsel %vm817, %v781, 0
      %v834 = vsel %vm817, %v782, 0
      %v837 = vsel %vm817, %v783, 0
      %v840 = vsel %vm817, %v784, 0
      %842 = vmatprep.subr.bf16.mxu0 0
      %843 = vmatpush1.bf16.msra.mxu0 %v809
      %844 = vmatprep.subr.bf16.mxu0 0
      %845 = vmatpush1.bf16.msra.mxu0 %v810
      %846 = vmatprep.subr.bf16.mxu0 0
      %847 = vmatpush1.bf16.msra.mxu0 %v811
      %848 = vmatprep.subr.bf16.mxu0 0
      %849 = vmatpush1.bf16.msra.mxu0 %v812
      %850 = vmatprep.subr.bf16.mxu0 0
      %851 = vmatpush1.bf16.msra.mxu0 0
      %852 = vmatprep.subr.bf16.mxu0 0
      %853 = vmatpush1.bf16.msra.mxu0 0
      %854 = vmatprep.subr.bf16.mxu0 0
      %855 = vmatpush1.bf16.msra.mxu0 0
      %856 = vmatprep.subr.bf16.mxu0 0
      %857 = vmatpush1.bf16.msra.mxu0 0
      %858 = vmatprep.subr.bf16.mxu0 0
      %859 = vmatpush1.bf16.msra.mxu0 0
      %860 = vmatprep.subr.bf16.mxu0 0
      %861 = vmatpush1.bf16.msra.mxu0 0
      %862 = vmatprep.subr.bf16.mxu0 0
      %863 = vmatpush1.bf16.msra.mxu0 0
      %864 = vmatprep.subr.bf16.mxu0 0
      %865 = vmatpush1.bf16.msra.mxu0 0
      %866 = vmatprep.subr.bf16.mxu0 0
      %867 = vmatpush1.bf16.msra.mxu0 0
      %868 = vmatprep.subr.bf16.mxu0 0
      %869 = vmatpush1.bf16.msra.mxu0 0
      %870 = vmatprep.subr.bf16.mxu0 0
      %871 = vmatpush1.bf16.msra.mxu0 0
      %872 = vmatprep.subr.bf16.mxu0 0
      %873 = vmatpush1.bf16.msra.mxu0 0
      %874 = vmatprep.mubr.bf16.mxu0 0
      %875 = vmatmul.mubr.bf16.gmra.mrb[0].mxu0 %v819
      %v876 = vpop.f32.mrb[0].mxu0
      %v877 = vadd.f32 0.0, %v876
      %v878 = vpop.f32.mrb[0].mxu0
      %v879 = vpop.f32.mrb[0].mxu0
      %v880 = vadd.f32 0.0, %v879
      %v881 = vpop.f32.mrb[0].mxu0
      %882 = vmatprep.mubr.bf16.mxu0 0
      %883 = vmatmul.mubr.bf16.gmra.mrb[0].mxu0 %v822
      %v884 = vpop.f32.mrb[0].mxu0
      %v885 = vadd.f32 0.0, %v884
      %v886 = vpop.f32.mrb[0].mxu0
      %v887 = vpop.f32.mrb[0].mxu0
      %v888 = vadd.f32 0.0, %v887
      %v889 = vpop.f32.mrb[0].mxu0
      %890 = vmatprep.mubr.bf16.mxu0 0
      %891 = vmatmul.mubr.bf16.gmra.mrb[0].mxu0 %v825
      %v892 = vpop.f32.mrb[0].mxu0
      %v893 = vadd.f32 0.0, %v892
      %v894 = vpop.f32.mrb[0].mxu0
      %v895 = vpop.f32.mrb[0].mxu0
      %v896 = vadd.f32 0.0, %v895
      %v897 = vpop.f32.mrb[0].mxu0
      %898 = vmatprep.mubr.bf16.mxu0 0
      %899 = vmatmul.mubr.bf16.gmra.mrb[0].mxu0 %v828
      %v900 = vpop.f32.mrb[0].mxu0
      %v901 = vadd.f32 0.0, %v900
      %v902 = vpop.f32.mrb[0].mxu0
      %v903 = vpop.f32.mrb[0].mxu0
      %v904 = vadd.f32 0.0, %v903
      %v905 = vpop.f32.mrb[0].mxu0
      %906 = vmatprep.mubr.bf16.mxu0 0
      %907 = vmatmul.mubr.bf16.gmra.mrb[0].mxu0 %v831
      %v908 = vpop.f32.mrb[0].mxu0
      %v909 = vadd.f32 0.0, %v908
      %v910 = vpop.f32.mrb[0].mxu0
      %v911 = vpop.f32.mrb[0].mxu0
      %v912 = vadd.f32 0.0, %v911
      %v913 = vpop.f32.mrb[0].mxu0
      %914 = vmatprep.mubr.bf16.mxu0 0
      %915 = vmatmul.mubr.bf16.gmra.mrb[0].mxu0 %v834
      %v916 = vpop.f32.mrb[0].mxu0
      %v917 = vadd.f32 0.0, %v916
      %v918 = vpop.f32.mrb[0].mxu0
      %v919 = vpop.f32.mrb[0].mxu0
      %v920 = vadd.f32 0.0, %v919
      %v921 = vpop.f32.mrb[0].mxu0
      %922 = vmatprep.mubr.bf16.mxu0 0
      %923 = vmatmul.mubr.bf16.gmra.mrb[0].mxu0 %v837
      %v924 = vpop.f32.mrb[0].mxu0
      %v925 = vadd.f32 0.0, %v924
      %v926 = vpop.f32.mrb[0].mxu0
      %v927 = vpop.f32.mrb[0].mxu0
      %v928 = vadd.f32 0.0, %v927
      %v929 = vpop.f32.mrb[0].mxu0
      %930 = vmatprep.mubr.bf16.mxu0 0
      %931 = vmatmul.mubr.bf16.gmra.mrb[0].mxu0 %v840
      %v932 = vpop.f32.mrb[0].mxu0
      %v933 = vadd.f32 0.0, %v932
      %v934 = vpop.f32.mrb[0].mxu0
      %v935 = vpop.f32.mrb[0].mxu0
      %v936 = vadd.f32 0.0, %v935
      %v937 = vpop.f32.mrb[0].mxu0
      %938 = vdwg.mxu0
      %v947 = vunpack.c.l.b16 %v769
      %v948 = vunpack.c.l.b16 %v770
      %v949 = vunpack.c.l.b16 %v771
      %v950 = vunpack.c.l.b16 %v772
      %v951 = vunpack.c.l.b16 %v773
      %v952 = vunpack.c.l.b16 %v774
      %v953 = vunpack.c.l.b16 %v775
      %v954 = vunpack.c.l.b16 %v776
      %v955 = vpack.c.b16 %v948, %v947
      %v956 = vpack.c.b16 %v950, %v949
      %v957 = vpack.c.b16 %v952, %v951
      %v958 = vpack.c.b16 %v954, %v953
      %v964 = vsel %vm817, %v761, 0
      %v967 = vsel %vm817, %v762, 0
      %v970 = vsel %vm817, %v763, 0
      %v973 = vsel %vm817, %v764, 0
      %v976 = vsel %vm817, %v765, 0
      %v979 = vsel %vm817, %v766, 0
      %v982 = vsel %vm817, %v767, 0
      %v985 = vsel %vm817, %v768, 0
      %987 = vmatprep.subr.bf16.mxu0 0
      %988 = vmatpush1.bf16.msra.mxu0 %v955
      %989 = vmatprep.subr.bf16.mxu0 0
      %990 = vmatpush1.bf16.msra.mxu0 %v956
      %991 = vmatprep.subr.bf16.mxu0 0
      %992 = vmatpush1.bf16.msra.mxu0 %v957
      %993 = vmatprep.subr.bf16.mxu0 0
      %994 = vmatpush1.bf16.msra.mxu0 %v958
      %995 = vmatprep.subr.bf16.mxu0 0
      %996 = vmatpush1.bf16.msra.mxu0 0
      %997 = vmatprep.subr.bf16.mxu0 0
      %998 = vmatpush1.bf16.msra.mxu0 0
      %999 = vmatprep.subr.bf16.mxu0 0
      %1000 = vmatpush1.bf16.msra.mxu0 0
      %1001 = vmatprep.subr.bf16.mxu0 0
      %1002 = vmatpush1.bf16.msra.mxu0 0
      %1003 = vmatprep.subr.bf16.mxu0 0
      %1004 = vmatpush1.bf16.msra.mxu0 0
      %1005 = vmatprep.subr.bf16.mxu0 0
      %1006 = vmatpush1.bf16.msra.mxu0 0
      %1007 = vmatprep.subr.bf16.mxu0 0
      %1008 = vmatpush1.bf16.msra.mxu0 0
      %1009 = vmatprep.subr.bf16.mxu0 0
      %1010 = vmatpush1.bf16.msra.mxu0 0
      %1011 = vmatprep.subr.bf16.mxu0 0
      %1012 = vmatpush1.bf16.msra.mxu0 0
      %1013 = vmatprep.subr.bf16.mxu0 0
      %1014 = vmatpush1.bf16.msra.mxu0 0
      %1015 = vmatprep.subr.bf16.mxu0 0
      %1016 = vmatpush1.bf16.msra.mxu0 0
      %1017 = vmatprep.subr.bf16.mxu0 0
      %1018 = vmatpush1.bf16.msra.mxu0 0
      %1019 = vmatprep.mubr.bf16.mxu0 0
      %1020 = vmatmul.mubr.bf16.gmra.mrb[0].mxu0 %v964
      %v1021 = vpop.f32.mrb[0].mxu0
      %v1022 = vadd.f32 %v877, %v1021
      %v1023 = vpop.f32.mrb[0].mxu0
      %v1024 = vpop.f32.mrb[0].mxu0
      %v1025 = vadd.f32 %v880, %v1024
      %v1026 = vpop.f32.mrb[0].mxu0
      %1027 = vmatprep.mubr.bf16.mxu0 0
      %1028 = vmatmul.mubr.bf16.gmra.mrb[0].mxu0 %v967
      %v1029 = vpop.f32.mrb[0].mxu0
      %v1030 = vadd.f32 %v885, %v1029
      %v1031 = vpop.f32.mrb[0].mxu0
      %v1032 = vpop.f32.mrb[0].mxu0
      %v1033 = vadd.f32 %v888, %v1032
      %v1034 = vpop.f32.mrb[0].mxu0
      %1035 = vmatprep.mubr.bf16.mxu0 0
      %1036 = vmatmul.mubr.bf16.gmra.mrb[0].mxu0 %v970
      %v1037 = vpop.f32.mrb[0].mxu0
      %v1038 = vadd.f32 %v893, %v1037
      %v1039 = vpop.f32.mrb[0].mxu0
      %v1040 = vpop.f32.mrb[0].mxu0
      %v1041 = vadd.f32 %v896, %v1040
      %v1042 = vpop.f32.mrb[0].mxu0
      %1043 = vmatprep.mubr.bf16.mxu0 0
      %1044 = vmatmul.mubr.bf16.gmra.mrb[0].mxu0 %v973
      %v1045 = vpop.f32.mrb[0].mxu0
      %v1046 = vadd.f32 %v901, %v1045
      %v1047 = vpop.f32.mrb[0].mxu0
      %v1048 = vpop.f32.mrb[0].mxu0
      %v1049 = vadd.f32 %v904, %v1048
      %v1050 = vpop.f32.mrb[0].mxu0
      %1051 = vmatprep.mubr.bf16.mxu0 0
      %1052 = vmatmul.mubr.bf16.gmra.mrb[0].mxu0 %v976
      %v1053 = vpop.f32.mrb[0].mxu0
      %v1054 = vadd.f32 %v909, %v1053
      %v1055 = vpop.f32.mrb[0].mxu0
      %v1056 = vpop.f32.mrb[0].mxu0
      %v1057 = vadd.f32 %v912, %v1056
      %v1058 = vpop.f32.mrb[0].mxu0
      %1059 = vmatprep.mubr.bf16.mxu0 0
      %1060 = vmatmul.mubr.bf16.gmra.mrb[0].mxu0 %v979
      %v1061 = vpop.f32.mrb[0].mxu0
      %v1062 = vadd.f32 %v917, %v1061
      %v1063 = vpop.f32.mrb[0].mxu0
      %v1064 = vpop.f32.mrb[0].mxu0
      %v1065 = vadd.f32 %v920, %v1064
      %v1066 = vpop.f32.mrb[0].mxu0
      %1067 = vmatprep.mubr.bf16.mxu0 0
      %1068 = vmatmul.mubr.bf16.gmra.mrb[0].mxu0 %v982
      %v1069 = vpop.f32.mrb[0].mxu0
      %v1070 = vadd.f32 %v925, %v1069
      %v1071 = vpop.f32.mrb[0].mxu0
      %v1072 = vpop.f32.mrb[0].mxu0
      %v1073 = vadd.f32 %v928, %v1072
      %v1074 = vpop.f32.mrb[0].mxu0
      %1075 = vmatprep.mubr.bf16.mxu0 0
      %1076 = vmatmul.mubr.bf16.gmra.mrb[0].mxu0 %v985
      %v1077 = vpop.f32.mrb[0].mxu0
      %v1078 = vadd.f32 %v933, %v1077
      %v1079 = vpop.f32.mrb[0].mxu0
      %v1080 = vpop.f32.mrb[0].mxu0
      %v1081 = vadd.f32 %v936, %v1080
      %v1082 = vpop.f32.mrb[0].mxu0
      %1083 = vdwg.mxu0
      %v1084 = vld [vmem:[%s8] sm:$0x1]
      %v1086 = vlaneseq
      %v1087 = vshrl.u32 %v1086, 7
      %v1088 = vsub.s32 0, %v1087
      %v1089 = vrot.slane %v1084, %v1088
      %v1091 = vadd.f32 %v1022, %v1089
      %v1092 = vadd.f32 %v1025, %v1089
      %v1093 = vadd.f32 %v1030, %v1089
      %v1094 = vadd.f32 %v1033, %v1089
      %v1095 = vadd.f32 %v1038, %v1089
      %v1096 = vadd.f32 %v1041, %v1089
      %v1097 = vadd.f32 %v1046, %v1089
      %v1098 = vadd.f32 %v1049, %v1089
      %v1099 = vadd.f32 %v1054, %v1089
      %v1100 = vadd.f32 %v1057, %v1089
      %v1101 = vadd.f32 %v1062, %v1089
      %v1102 = vadd.f32 %v1065, %v1089
      %v1103 = vadd.f32 %v1070, %v1089
      %v1104 = vadd.f32 %v1073, %v1089
      %v1105 = vadd.f32 %v1078, %v1089
      %v1106 = vadd.f32 %v1081, %v1089
      %v1107 = vmax.f32 %v1091, 0.0
      %v1108 = vmax.f32 %v1092, 0.0
      %v1109 = vmax.f32 %v1093, 0.0
      %v1110 = vmax.f32 %v1094, 0.0
      %v1111 = vmax.f32 %v1095, 0.0
      %v1112 = vmax.f32 %v1096, 0.0
      %v1113 = vmax.f32 %v1097, 0.0
      %v1114 = vmax.f32 %v1098, 0.0
      %v1115 = vmax.f32 %v1099, 0.0
      %v1116 = vmax.f32 %v1100, 0.0
      %v1117 = vmax.f32 %v1101, 0.0
      %v1118 = vmax.f32 %v1102, 0.0
      %v1119 = vmax.f32 %v1103, 0.0
      %v1120 = vmax.f32 %v1104, 0.0
      %v1121 = vmax.f32 %v1105, 0.0
      %v1122 = vmax.f32 %v1106, 0.0
      %v1123 = vld [vmem:[%s9] sm:$0x1]
      %v1124 = vld [vmem:[#allocation2] sm:$0x1]
      %1126 = vset.pattern.permute.xlu0 0
      %1127 = vperm.xlu0 %1126, %v1124
      %v1128 = vpop.permute.xlu0 %1127
      %v1130 = vlaneseq
      %v1131 = vshrl.u32 %v1130, 7
      %v1132 = vsub.s32 0, %v1131
      %v1133 = vrot.slane %v1128, %v1132
      %vm1134 = vcmask 261120
      %v1136 = vsel %vm1134, %v1123, 0
      %v1139 = vsel %vm1134, %v1107, 0
      %v1142 = vsel %vm1134, %v1108, 0
      %v1145 = vsel %vm1134, %v1109, 0
      %v1148 = vsel %vm1134, %v1110, 0
      %v1151 = vsel %vm1134, %v1111, 0
      %v1154 = vsel %vm1134, %v1112, 0
      %v1157 = vsel %vm1134, %v1113, 0
      %v1160 = vsel %vm1134, %v1114, 0
      %v1163 = vsel %vm1134, %v1115, 0
      %v1166 = vsel %vm1134, %v1116, 0
      %v1169 = vsel %vm1134, %v1117, 0
      %v1172 = vsel %vm1134, %v1118, 0
      %v1175 = vsel %vm1134, %v1119, 0
      %v1178 = vsel %vm1134, %v1120, 0
      %v1181 = vsel %vm1134, %v1121, 0
      %v1184 = vsel %vm1134, %v1122, 0
      %1186 = vmatprep.subr.mxu0 0.0
      %1187 = vmatpush1.xpose.msra.mxu0 %v1139
      %1188 = vmatprep.subr.mxu0 0.0
      %1189 = vmatpush1.xpose.msra.mxu0 %v1142
      %1190 = vmatprep.subr.mxu0 0.0
      %1191 = vmatpush1.xpose.msra.mxu0 %v1145
      %1192 = vmatprep.subr.mxu0 0.0
      %1193 = vmatpush1.xpose.msra.mxu0 %v1148
      %1194 = vmatprep.subr.mxu0 0.0
      %1195 = vmatpush1.xpose.msra.mxu0 %v1151
      %1196 = vmatprep.subr.mxu0 0.0
      %1197 = vmatpush1.xpose.msra.mxu0 %v1154
      %1198 = vmatprep.subr.mxu0 0.0
      %1199 = vmatpush1.xpose.msra.mxu0 %v1157
      %1200 = vmatprep.subr.mxu0 0.0
      %1201 = vmatpush1.xpose.msra.mxu0 %v1160
      %1202 = vmatprep.subr.mxu0 0.0
      %1203 = vmatpush1.xpose.msra.mxu0 %v1163
      %1204 = vmatprep.subr.mxu0 0.0
      %1205 = vmatpush1.xpose.msra.mxu0 %v1166
      %1206 = vmatprep.subr.mxu0 0.0
      %1207 = vmatpush1.xpose.msra.mxu0 %v1169
      %1208 = vmatprep.subr.mxu0 0.0
      %1209 = vmatpush1.xpose.msra.mxu0 %v1172
      %1210 = vmatprep.subr.mxu0 0.0
      %1211 = vmatpush1.xpose.msra.mxu0 %v1175
      %1212 = vmatprep.subr.mxu0 0.0
      %1213 = vmatpush1.xpose.msra.mxu0 %v1178
      %1214 = vmatprep.subr.mxu0 0.0
      %1215 = vmatpush1.xpose.msra.mxu0 %v1181
      %1216 = vmatprep.subr.mxu0 0.0
      %1217 = vmatpush1.xpose.msra.mxu0 %v1184
      %1218 = vmatprep.subr.mxu0 0.0
      %1219 = vmatpush1.xpose.msra.mxu0 0.0
      %1220 = vmatprep.subr.mxu0 0.0
      %1221 = vmatpush1.xpose.msra.mxu0 0.0
      %1222 = vmatprep.subr.mxu0 0.0
      %1223 = vmatpush1.xpose.msra.mxu0 0.0
      %1224 = vmatprep.subr.mxu0 0.0
      %1225 = vmatpush1.xpose.msra.mxu0 0.0
      %1226 = vmatprep.subr.mxu0 0.0
      %1227 = vmatpush1.xpose.msra.mxu0 0.0
      %1228 = vmatprep.subr.mxu0 0.0
      %1229 = vmatpush1.xpose.msra.mxu0 0.0
      %1230 = vmatprep.subr.mxu0 0.0
      %1231 = vmatpush1.xpose.msra.mxu0 0.0
      %1232 = vmatprep.subr.mxu0 0.0
      %1233 = vmatpush1.xpose.msra.mxu0 0.0
      %1234 = vmatprep.subr.mxu0 0.0
      %1235 = vmatpush1.xpose.msra.mxu0 0.0
      %1236 = vmatprep.subr.mxu0 0.0
      %1237 = vmatpush1.xpose.msra.mxu0 0.0
      %1238 = vmatprep.subr.mxu0 0.0
      %1239 = vmatpush1.xpose.msra.mxu0 0.0
      %1240 = vmatprep.subr.mxu0 0.0
      %1241 = vmatpush1.xpose.msra.mxu0 0.0
      %1242 = vmatprep.subr.mxu0 0.0
      %1243 = vmatpush1.xpose.msra.mxu0 0.0
      %1244 = vmatprep.subr.mxu0 0.0
      %1245 = vmatpush1.xpose.msra.mxu0 0.0
      %1246 = vmatprep.subr.mxu0 0.0
      %1247 = vmatpush1.xpose.msra.mxu0 0.0
      %1248 = vmatprep.subr.mxu0 0.0
      %1249 = vmatpush1.xpose.msra.mxu0 0.0
      %1250 = vmatprep.mubr.f32.mxu0 0.0
      %1251 = vmatmul.mubr.f32.gmra.mrb[0].mxu0 %v1136
      %v1252 = vpop.f32.mrb[0].mxu0
      %v1253 = vadd.f32 %v1133, %v1252
      %v1254 = vpop.f32.mrb[0].mxu0
      %1255 = vdwg.mxu0
      %1256 = vst [vmem:[%s408] sm:$0x1] %v1253
      %p1257 = scmp.lt.s32.totalorder %s24, 1
      %s1258 = scalar_select %p1257, %s24, 1
      %s1259 = scalar_lea.vmem %s11, %s1258
      // Predicated region
      $region65: #{critic_agent_forward.1} parent=63 // pred_check
        %p1260 = pneg %p283
      $region66: #{critic_agent_forward.1} parent=63 // pred_check_branch
        %1262 = sbr.rel (%p1260) target = $region68
      $region67: #{critic_agent_forward.1} parent=63 // pred_region
        _
      $region68: #{critic_agent_forward.1} parent=63 // pred_fallthru
        _
    $region64: #{critic_agent_forward.1} parent=5 // pred_fallthru
      _
    %p1263 = scmp.le.s32.totalorder 2, %s19
    // Predicated region
    $region69: #{critic_agent_forward.1} parent=5 // pred_check
      %p1264 = pneg %p1263
    $region70: #{critic_agent_forward.1} parent=5 // pred_check_branch
      %1266 = sbr.rel (%p1264) target = $region72
    $region71: #{critic_agent_forward.1} parent=5 // pred_region
      %s1267 = ssub.s32 %s19, 2
      // Predicated region
      $region73: #{critic_agent_forward.1} parent=71 // pred_check
        %p1268 = pneg %p289
      $region74: #{critic_agent_forward.1} parent=71 // pred_check_branch
        %1270 = sbr.rel (%p1268) target = $region76
      $region75: #{critic_agent_forward.1} parent=71 // pred_region
        %p1271 = scmp.lt.s32.totalorder %s25, 1
        %s1272 = scalar_select %p1271, %s25, 1
        %s1273 = scalar_lea.vmem %s11, %s1272
      $region76: #{critic_agent_forward.1} parent=71 // pred_fallthru
        _
    $region72: #{critic_agent_forward.1} parent=5 // pred_fallthru
      _
  $region6: #{critic_agent_forward.1} parent=0 // loop_footer
    %s23 = sadd.s32 1, %s19
  $region7: #{critic_agent_forward.1} parent=0 // loop_footer_branch
    %18 = sbr.rel target = $region3
  $region8: #{critic_agent_forward.1} parent=0 // loop_exit
    _

</llo_original>
